<compile_context>
chip_gen: v5e
topology: v5e:2x2
jax: 0.10.0
libtpu: 0.0.40
codegen_flags: <defaults>
</compile_context>

<pallas_src>
from typing import NamedTuple

import jax
import jax.numpy as jnp
from jax.experimental import pallas as pl
from jax.experimental.pallas import tpu as pltpu

LANE = 128


def _round_up(x, m):
    return ((x + m - 1) // m) * m


def _cdiv(a, b):
    return (a + b - 1) // b


class PackedDims(NamedTuple):
    input_sz: int
    n_fc1: int
    n_fc2: int
    output_sz: int
    in_rows: int   # sublane-padded row count of the W1 band
    d_h1: int      # lane-padded hidden1 width
    d_h2: int      # lane-padded hidden2 width
    d_out: int     # lane-padded output width (lane-dense store)
    d_cols: int    # column width of the packed weight buffer
    w_rows: int    # total rows of the packed weight buffer


def pack_params(params, compute_dtype=jnp.float32):
    """Pack (w1,b1,w2,b2,w3,b3) into one lane-padded weight slab + an f32 bias slab.

    Weights are zero-padded so that layers 2/3 contract over the full lane-padded
    hidden width (padded hidden columns stay exactly zero through bias-add + ReLU).
    Biases are kept in a separate f32 buffer so they are never quantized, even
    when the weights are stored in bf16 for the MXU.
    """
    w1, b1, w2, b2, w3, b3 = params
    input_sz, n_fc1 = w1.shape
    n_fc2 = w2.shape[1]
    output_sz = w3.shape[1]

    in_rows = _round_up(max(input_sz, 1), 8)
    d_h1 = _round_up(n_fc1, LANE)
    d_h2 = _round_up(n_fc2, LANE)
    d_out = _round_up(output_sz, LANE)
    # NOTE: for very large hidden sizes (>= ~2k) on v7x (64 MiB VMEM), pack each
    # layer at its own padded width (or pass per-layer inputs) instead of one
    # max-width slab; at CIRL policy sizes all widths pad to 128 so it is moot.
    d_cols = max(d_h1, d_h2, d_out)
    w_rows = in_rows + d_h1 + d_h2

    wp = jnp.zeros((w_rows, d_cols), jnp.float32)
    wp = wp.at[:input_sz, :n_fc1].set(w1)
    wp = wp.at[in_rows:in_rows + n_fc1, :n_fc2].set(w2)
    wp = wp.at[in_rows + d_h1:in_rows + d_h1 + n_fc2, :output_sz].set(w3)
    wp = wp.astype(compute_dtype)

    bp = jnp.zeros((8, d_cols), jnp.float32)   # rows 0/1/2 hold b1/b2/b3 (f32, exact)
    bp = bp.at[0, :n_fc1].set(b1)
    bp = bp.at[1, :n_fc2].set(b2)
    bp = bp.at[2, :output_sz].set(b3)

    dims = PackedDims(input_sz, n_fc1, n_fc2, output_sz,
                      in_rows, d_h1, d_h2, d_out, d_cols, w_rows)
    return wp, bp, dims


def _make_kernel(dims: PackedDims, compute_dtype):
    input_sz, d_h1, d_h2, d_out = dims.input_sz, dims.d_h1, dims.d_h2, dims.d_out
    r_w2 = dims.in_rows
    r_w3 = dims.in_rows + d_h1

    # TODO(synk): activation() is assumed to be ReLU; swap jnp.maximum for the
    # configured activation if the CIRL config uses a different one (the explicit
    # bias-add path is safe for any activation, unlike the old ones-carry packing).
    def kernel(x_ref, w_ref, b_ref, o_ref):
        x = x_ref[...]                                   # (tile_b, input_sz) compute dtype
        w1 = w_ref[0:input_sz, 0:d_h1]                   # static, VMEM-resident views
        w2 = w_ref[r_w2:r_w2 + d_h1, 0:d_h2]
        w3 = w_ref[r_w3:r_w3 + d_h2, 0:d_out]
        b1 = b_ref[0:1, 0:d_h1]                          # f32 broadcast bias rows
        b2 = b_ref[1:2, 0:d_h2]
        b3 = b_ref[2:3, 0:d_out]

        h = jnp.dot(x, w1, preferred_element_type=jnp.float32) + b1
        h = jnp.maximum(h, 0.0)                          # ReLU (f32 VPU)
        h = jnp.dot(h.astype(compute_dtype), w2, preferred_element_type=jnp.float32) + b2
        h = jnp.maximum(h, 0.0)
        h = jnp.dot(h.astype(compute_dtype), w3, preferred_element_type=jnp.float32) + b3
        o_ref[...] = jnp.tanh(h).astype(o_ref.dtype)     # tanh on EUP, f32 epilogue

    return kernel


def net_forward(x, wpack, bpack, dims: PackedDims, *, tile_b=1024,
                out_dtype=jnp.float32):
    """Batched MLP forward. `wpack`/`bpack`/`dims` come from pack_params() (done once)."""
    compute_dtype = wpack.dtype
    batch = x.shape[0]

    # Batch tile: multiple of the sublane pack (8 f32 / 16 bf16), capped at tile_b,
    # and clamped so the batch grid keeps >= 2 steps whenever the batch allows
    # (lets the "parallel" axis shard across both v7x TensorCores).
    sub = 16 if compute_dtype == jnp.bfloat16 else 8
    batch_sub = _round_up(batch, sub)
    half = _round_up(_cdiv(batch_sub, 2), sub)
    tile_b_eff = max(sub, min(_round_up(tile_b, sub), half))
    b_pad = _round_up(batch, tile_b_eff)

    # Only wrapper-side data movement left: optional dtype cast + tiny batch pad,
    # both over the *raw* input_sz width (no 128-lane feature padding anymore).
    x_in = x if x.dtype == compute_dtype else x.astype(compute_dtype)
    if b_pad != batch:
        x_in = jnp.pad(x_in, ((0, b_pad - batch), (0, 0)))

    grid = (b_pad // tile_b_eff,)

    flops = 2 * b_pad * (dims.input_sz * dims.d_h1
                         + dims.d_h1 * dims.d_h2
                         + dims.d_h2 * dims.d_out)
    bytes_accessed = (x_in.size * x_in.dtype.itemsize
                      + wpack.size * wpack.dtype.itemsize
                      + bpack.size * bpack.dtype.itemsize
                      + b_pad * dims.d_out * jnp.dtype(out_dtype).itemsize)

    out = pl.pallas_call(
        _make_kernel(dims, compute_dtype),
        out_shape=jax.ShapeDtypeStruct((b_pad, dims.d_out), out_dtype),
        grid=grid,
        in_specs=[
            # last dim equals the full array dim -> (8,128) rule satisfied unpadded.
            pl.BlockSpec((tile_b_eff, dims.input_sz), lambda i: (i, 0)),
            # Constant block index -> parameters stay VMEM-resident across steps.
            pl.BlockSpec((dims.w_rows, dims.d_cols), lambda i: (0, 0)),
            pl.BlockSpec((8, dims.d_cols), lambda i: (0, 0)),
        ],
        out_specs=pl.BlockSpec((tile_b_eff, dims.d_out), lambda i: (i, 0)),
        compiler_params=pltpu.CompilerParams(
            dimension_semantics=("parallel",)),   # batch tiles shard across TCs on v7x
        cost_estimate=pl.CostEstimate(
            flops=int(flops),
            transcendentals=int(b_pad * dims.d_out),
            bytes_accessed=int(bytes_accessed)),
    )(x_in, wpack, bpack)

    # Semantics of Net.forward require the exact (batch, output_sz) result; jit the
    # caller to fuse this slice (or consume the padded buffer directly) if the extra
    # HBM pass matters downstream.
    return out[:batch, :dims.output_sz]


def init_params(key, input_sz, n_fc1, n_fc2, output_sz):
    """Deterministic synthetic init (PyTorch-Linear-like uniform bounds)."""
    ks = jax.random.split(key, 6)

    def lin(kw, kb, fan_in, fan_out):
        bound = 1.0 / jnp.sqrt(fan_in)
        w = jax.random.uniform(kw, (fan_in, fan_out), jnp.float32, -bound, bound)
        b = jax.random.uniform(kb, (fan_out,), jnp.float32, -bound, bound)
        return w, b

    w1, b1 = lin(ks[0], ks[1], input_sz, n_fc1)
    w2, b2 = lin(ks[2], ks[3], n_fc1, n_fc2)
    w3, b3 = lin(ks[4], ks[5], n_fc2, output_sz)
    return (w1, b1, w2, b2, w3, b3)


def ref_forward(x, params):
    w1, b1, w2, b2, w3, b3 = params
    h = jnp.maximum(x @ w1 + b1, 0.0)
    h = jnp.maximum(h @ w2 + b2, 0.0)
    return jnp.tanh(h @ w3 + b3)


if __name__ == "__main__":
    batch, input_sz, n_fc1, n_fc2, output_sz = 8, 16, 32, 32, 8

    key = jax.random.PRNGKey(0)
    k_x, k_p, k_x2 = jax.random.split(key, 3)
    x = jax.random.normal(k_x, (batch, input_sz), dtype=jnp.float32)
    params = init_params(k_p, input_sz, n_fc1, n_fc2, output_sz)

    # f32 path, small batch (single grid step).
    wp_f32, bp_f32, dims = pack_params(params, jnp.float32)
    y = net_forward(x, wp_f32, bp_f32, dims)
    jax.block_until_ready(y)
    ref = ref_forward(x, params)
    assert y.shape == (batch, output_sz)
    assert jnp.allclose(y, ref, atol=1e-5, rtol=1e-5)

    # Ragged larger batch exercising a 2-step batch grid (megacore on v7x) + padding.
    x2 = jax.random.normal(k_x2, (300, input_sz), dtype=jnp.float32)
    y2 = net_forward(x2, wp_f32, bp_f32, dims)
    jax.block_until_ready(y2)
    ref2 = ref_forward(x2, params)
    assert y2.shape == (300, output_sz)
    assert jnp.allclose(y2, ref2, atol=1e-5, rtol=1e-5)

    # bf16 MXU-input path (recommended on v5e/v6e/v7x); weights/x in bf16, f32
    # accumulation, exact f32 biases, f32 ReLU/tanh epilogue.  Tolerance reflects
    # bf16 weight quantization (~1e-2 near tanh saturation), fine for a policy net.
    wp_bf16, bp_bf16, dims_b = pack_params(params, jnp.bfloat16)
    y3 = net_forward(x2, wp_bf16, bp_bf16, dims_b)
    jax.block_until_ready(y3)
    assert y3.shape == (300, output_sz)
    assert jnp.allclose(y3, ref2, atol=5e-2, rtol=5e-2)

    print("KERNEL_OK")
</pallas_src>

<mosaic_0001>
module attributes {stable_mosaic.version = 11 : i64} {
  func.func @kernel(%arg0: i32, %arg1: memref<8x16xf32, #tpu.memory_space<vmem>>, %arg2: memref<272x128xf32, #tpu.memory_space<vmem>>, %arg3: memref<8x128xf32, #tpu.memory_space<vmem>>, %arg4: memref<8x128xf32, #tpu.memory_space<vmem>>) attributes {dimension_semantics = [#tpu.dimension_semantics<parallel>], iteration_bounds = array<i64: 1>, scalar_prefetch = 0 : i64, scratch_operands = 0 : i64, tpu.core_type = #tpu.core_type<tc>, window_params = [{transform_indices = @transform_0, window_bounds = array<i64: 8, 16>}, {pipeline_mode = #tpu.pipeline_mode<synchronous>, transform_indices = @transform_1, window_bounds = array<i64: 272, 128>}, {pipeline_mode = #tpu.pipeline_mode<synchronous>, transform_indices = @transform_2, window_bounds = array<i64: 8, 128>}, {transform_indices = @transform_3, window_bounds = array<i64: 8, 128>}]} {
    %c0 = arith.constant 0 : index
    %c0_0 = arith.constant 0 : index
    %0 = vector.load %arg1[%c0, %c0_0] : memref<8x16xf32, #tpu.memory_space<vmem>>, vector<8x16xf32>
    %c0_1 = arith.constant 0 : index
    %c0_2 = arith.constant 0 : index
    %1 = vector.load %arg2[%c0_1, %c0_2] : memref<272x128xf32, #tpu.memory_space<vmem>>, vector<16x128xf32>
    %c16 = arith.constant 16 : index
    %c0_3 = arith.constant 0 : index
    %2 = vector.load %arg2[%c16, %c0_3] : memref<272x128xf32, #tpu.memory_space<vmem>>, vector<128x128xf32>
    %c144 = arith.constant 144 : index
    %c0_4 = arith.constant 0 : index
    %3 = vector.load %arg2[%c144, %c0_4] : memref<272x128xf32, #tpu.memory_space<vmem>>, vector<128x128xf32>
    %c0_5 = arith.constant 0 : index
    %c0_6 = arith.constant 0 : index
    %4 = vector.load %arg3[%c0_5, %c0_6] : memref<8x128xf32, #tpu.memory_space<vmem>>, vector<1x128xf32>
    %c1 = arith.constant 1 : index
    %c0_7 = arith.constant 0 : index
    %5 = vector.load %arg3[%c1, %c0_7] : memref<8x128xf32, #tpu.memory_space<vmem>>, vector<1x128xf32>
    %c2 = arith.constant 2 : index
    %c0_8 = arith.constant 0 : index
    %6 = vector.load %arg3[%c2, %c0_8] : memref<8x128xf32, #tpu.memory_space<vmem>>, vector<1x128xf32>
    %cst = arith.constant dense<0.000000e+00> : vector<8x128xf32>
    %7 = tpu.matmul %0, %1, %cst {dimension_numbers = #tpu.dot_dimension_numbers<[1], [0], [0], [1], [0, 0, 1, 1], [], []>} : vector<8x16xf32>, vector<16x128xf32>, vector<8x128xf32> -> vector<8x128xf32>
    %8 = vector.broadcast %4 : vector<1x128xf32> to vector<8x128xf32>
    %9 = arith.addf %7, %8 : vector<8x128xf32>
    %cst_9 = arith.constant 0.000000e+00 : f32
    %10 = vector.broadcast %cst_9 : f32 to vector<8x128xf32>
    %11 = arith.maximumf %9, %10 : vector<8x128xf32>
    %cst_10 = arith.constant dense<0.000000e+00> : vector<8x128xf32>
    %12 = tpu.matmul %11, %2, %cst_10 {dimension_numbers = #tpu.dot_dimension_numbers<[1], [0], [0], [1], [0, 0, 1, 1], [], []>} : vector<8x128xf32>, vector<128x128xf32>, vector<8x128xf32> -> vector<8x128xf32>
    %13 = vector.broadcast %5 : vector<1x128xf32> to vector<8x128xf32>
    %14 = arith.addf %12, %13 : vector<8x128xf32>
    %cst_11 = arith.constant 0.000000e+00 : f32
    %15 = vector.broadcast %cst_11 : f32 to vector<8x128xf32>
    %16 = arith.maximumf %14, %15 : vector<8x128xf32>
    %cst_12 = arith.constant dense<0.000000e+00> : vector<8x128xf32>
    %17 = tpu.matmul %16, %3, %cst_12 {dimension_numbers = #tpu.dot_dimension_numbers<[1], [0], [0], [1], [0, 0, 1, 1], [], []>} : vector<8x128xf32>, vector<128x128xf32>, vector<8x128xf32> -> vector<8x128xf32>
    %18 = vector.broadcast %6 : vector<1x128xf32> to vector<8x128xf32>
    %19 = arith.addf %17, %18 : vector<8x128xf32>
    %20 = math.tanh %19 : vector<8x128xf32>
    %c0_13 = arith.constant 0 : index
    %c0_14 = arith.constant 0 : index
    %21 = vector.load %arg4[%c0_13, %c0_14] : memref<8x128xf32, #tpu.memory_space<vmem>>, vector<8x128xf32>
    tpu.vector_store %arg4[%c0_13, %c0_14], %20 {strides = array<i32>} : memref<8x128xf32, #tpu.memory_space<vmem>>, vector<8x128xf32>,
    return
  }
  func.func @transform_0(%arg0: i32) -> (i32, i32) {
    %c0_i32 = arith.constant 0 : i32
    %c0_i32_0 = arith.constant 0 : i32
    return %arg0, %c0_i32 : i32, i32
  }
  func.func @transform_1(%arg0: i32) -> (i32, i32) {
    %c0_i32 = arith.constant 0 : i32
    %c0_i32_0 = arith.constant 0 : i32
    %c0_i32_1 = arith.constant 0 : i32
    return %c0_i32, %c0_i32_0 : i32, i32
  }
  func.func @transform_2(%arg0: i32) -> (i32, i32) {
    %c0_i32 = arith.constant 0 : i32
    %c0_i32_0 = arith.constant 0 : i32
    %c0_i32_1 = arith.constant 0 : i32
    return %c0_i32, %c0_i32_0 : i32, i32
  }
  func.func @transform_3(%arg0: i32) -> (i32, i32) {
    %c0_i32 = arith.constant 0 : i32
    %c0_i32_0 = arith.constant 0 : i32
    return %arg0, %c0_i32 : i32, i32
  }
}

</mosaic_0001>

<llo_original>
// kernel: tpu_custom_call.1
$region0: #{tpu_custom_call.1}
  #allocation0 [shape = 'u32[]', space=smem, size = 0x4, offset = 0x4, fixed_abs, tag = 'smem constant byte address 0x4 - core index']
  #allocation1 [shape = 'u32[72,128]{1,0:T(1,128)}', space=vmem, size = 0x9000, scoped, tag = 'internal scratch']
  %s0 = inlined_call_operand.hbm [shape: f32[8,16], index: 0, kind: input, shape index: {}]
  %s1 = inlined_call_operand.hbm [shape: f32[272,128], index: 1, kind: input, shape index: {}]
  %s2 = inlined_call_operand.hbm [shape: f32[8,128], index: 2, kind: input, shape index: {}]
  %s3 = inlined_call_operand.hbm [shape: f32[8,128], index: 3, kind: output, shape index: {}]
  %s4 = sld [smem:[#allocation0]]
  $region34: #{tpu_custom_call.1} parent=0
    _
  %s6 = ssub.s32 1, %s4
  %s7 = scalar_select 0, %s6, %s4
  $region1: #{tpu_custom_call.1} parent=0
    #allocation2 [shape = 'u8[4096]{0}', space=vmem, size = 0x1000, scoped, tag = 'input window, operand 0, single buffered']
    #allocation3 [shape = 's32[1]{0}', space=sflag, size = 0x4, scoped, tag = 'scoped memory for tpu_custom_call.1']
    #allocation4 [shape = 's32[1]{0}', space=sflag, size = 0x4, scoped, tag = 'scoped memory for tpu_custom_call.1']
    #allocation5 [shape = 'u8[139264]{0}', space=vmem, size = 0x22000, scoped, tag = 'input window, operand 1, single buffered']
    #allocation6 [shape = 's32[1]{0}', space=sflag, size = 0x4, scoped, tag = 'scoped memory for tpu_custom_call.1']
    #allocation7 [shape = 'u8[4096]{0}', space=vmem, size = 0x1000, scoped, tag = 'input window, operand 2, single buffered']
    #allocation8 [shape = 'u8[4096]{0}', space=vmem, size = 0x1000, scoped, tag = 'output window, operand 0, single buffered']
    %8 = vsyncpa [#allocation3], 0
    %9 = vsyncpa [#allocation6], 0
    %10 = vsyncpa [#allocation4], 0
    // Predicated region
    $region2: #{tpu_custom_call.1} parent=1 // pred_check
      _
    $region3: #{tpu_custom_call.1} parent=1 // pred_check_branch
      %12 = sbr.rel (0) target = $region5
    $region4: #{tpu_custom_call.1} parent=1 // pred_region
      %14 = vsyncadd [#allocation3], 0
      %s16 = sshll.u32 %s0, 4
      %s17 = int_to_ptr.hbm [resolvable:$true] %s16
      %s18 = sshll.u32 [#allocation2], 4
      %s19 = int_to_ptr.vmem [resolvable:$true] %s18
      %21 = dma.hbm_to_vmem [thread:$0]  %s17, 128, %s19, [#allocation3]
    $region5: #{tpu_custom_call.1} parent=1 // pred_fallthru
      _
    // Predicated region
    $region6: #{tpu_custom_call.1} parent=1 // pred_check
      _
    $region7: #{tpu_custom_call.1} parent=1 // pred_check_branch
      %23 = sbr.rel (0) target = $region9
    $region8: #{tpu_custom_call.1} parent=1 // pred_region
      %25 = vsyncadd [#allocation6], 0
      %s26 = sshll.u32 %s1, 4
      %s27 = int_to_ptr.hbm [resolvable:$true] %s26
      %s28 = sshll.u32 [#allocation5], 4
      %s29 = int_to_ptr.vmem [resolvable:$true] %s28
      %34 = dma.hbm_to_vmem [thread:$0]  %s27, 4352, %s29, [#allocation6], 128, 128, 8
    $region9: #{tpu_custom_call.1} parent=1 // pred_fallthru
      _
    // Predicated region
    $region10: #{tpu_custom_call.1} parent=1 // pred_check
      _
    $region11: #{tpu_custom_call.1} parent=1 // pred_check_branch
      %36 = sbr.rel (0) target = $region13
    $region12: #{tpu_custom_call.1} parent=1 // pred_region
      %38 = vsyncadd [#allocation6], 0
      %s40 = sshll.u32 %s2, 4
      %s41 = int_to_ptr.hbm [resolvable:$true] %s40
      %s42 = sshll.u32 [#allocation7], 4
      %s43 = int_to_ptr.vmem [resolvable:$true] %s42
      %45 = dma.hbm_to_vmem [thread:$0]  %s41, 128, %s43, [#allocation6]
    $region13: #{tpu_custom_call.1} parent=1 // pred_fallthru
      _
    // Predicated region
    $region14: #{tpu_custom_call.1} parent=1 // pred_check
      _
    $region15: #{tpu_custom_call.1} parent=1 // pred_check_branch
      %47 = sbr.rel (0) target = $region17
    $region16: #{tpu_custom_call.1} parent=1 // pred_region
      %49 = dma.done [#allocation3], 128
    $region17: #{tpu_custom_call.1} parent=1 // pred_fallthru
      _
    // Predicated region
    $region18: #{tpu_custom_call.1} parent=1 // pred_check
      _
    $region19: #{tpu_custom_call.1} parent=1 // pred_check_branch
      %51 = sbr.rel (0) target = $region21
    $region20: #{tpu_custom_call.1} parent=1 // pred_region
      %53 = dma.done [#allocation6], 4352
    $region21: #{tpu_custom_call.1} parent=1 // pred_fallthru
      _
    // Predicated region
    $region22: #{tpu_custom_call.1} parent=1 // pred_check
      _
    $region23: #{tpu_custom_call.1} parent=1 // pred_check_branch
      %55 = sbr.rel (0) target = $region25
    $region24: #{tpu_custom_call.1} parent=1 // pred_region
      %57 = dma.done [#allocation6], 128
    $region25: #{tpu_custom_call.1} parent=1 // pred_fallthru
      _
    %v58 = vld [vmem:[#allocation2] sm:$0xff]
    %v59 = vld [vmem:[#allocation5] sm:$0xff]
    %v60 = vld [vmem:[#allocation5 + $0x8] sm:$0xff]
    %v61 = vld [vmem:[#allocation5 + $0x10] sm:$0xff]
    %v62 = vld [vmem:[#allocation5 + $0x18] sm:$0xff]
    %v63 = vld [vmem:[#allocation5 + $0x20] sm:$0xff]
    %v64 = vld [vmem:[#allocation5 + $0x28] sm:$0xff]
    %v65 = vld [vmem:[#allocation5 + $0x30] sm:$0xff]
    %v66 = vld [vmem:[#allocation5 + $0x38] sm:$0xff]
    %v67 = vld [vmem:[#allocation5 + $0x40] sm:$0xff]
    %v68 = vld [vmem:[#allocation5 + $0x48] sm:$0xff]
    %v69 = vld [vmem:[#allocation5 + $0x50] sm:$0xff]
    %v70 = vld [vmem:[#allocation5 + $0x58] sm:$0xff]
    %v71 = vld [vmem:[#allocation5 + $0x60] sm:$0xff]
    %v72 = vld [vmem:[#allocation5 + $0x68] sm:$0xff]
    %v73 = vld [vmem:[#allocation5 + $0x70] sm:$0xff]
    %v74 = vld [vmem:[#allocation5 + $0x78] sm:$0xff]
    %v75 = vld [vmem:[#allocation5 + $0x80] sm:$0xff]
    %v76 = vld [vmem:[#allocation5 + $0x88] sm:$0xff]
    %v77 = vld [vmem:[#allocation5 + $0x90] sm:$0xff]
    %v78 = vld [vmem:[#allocation5 + $0x98] sm:$0xff]
    %v79 = vld [vmem:[#allocation5 + $0xa0] sm:$0xff]
    %v80 = vld [vmem:[#allocation5 + $0xa8] sm:$0xff]
    %v81 = vld [vmem:[#allocation5 + $0xb0] sm:$0xff]
    %v82 = vld [vmem:[#allocation5 + $0xb8] sm:$0xff]
    %v83 = vld [vmem:[#allocation5 + $0xc0] sm:$0xff]
    %v84 = vld [vmem:[#allocation5 + $0xc8] sm:$0xff]
    %v85 = vld [vmem:[#allocation5 + $0xd0] sm:$0xff]
    %v86 = vld [vmem:[#allocation5 + $0xd8] sm:$0xff]
    %v87 = vld [vmem:[#allocation5 + $0xe0] sm:$0xff]
    %v88 = vld [vmem:[#allocation5 + $0xe8] sm:$0xff]
    %v89 = vld [vmem:[#allocation5 + $0xf0] sm:$0xff]
    %v90 = vld [vmem:[#allocation5 + $0xf8] sm:$0xff]
    %v91 = vld [vmem:[#allocation5 + $0x100] sm:$0xff]
    %v92 = vld [vmem:[#allocation5 + $0x108] sm:$0xff]
    %v93 = vld [vmem:[#allocation7] sm:$0x1]
    %v94 = vld [vmem:[#allocation7 + $0x1] sm:$0x1]
    %v95 = vld [vmem:[#allocation7 + $0x2] sm:$0x1]
    %v96 = vperm.slane %v93, 0
    %vm97 = vcmask 130048
    %v99 = vsel %vm97, %v58, 0
    %101 = vmatpush.msra.mxu0 0.0
    %102 = vmatpush.msra.mxu0 0.0
    %103 = vmatpush.msra.mxu0 0.0
    %104 = vmatpush.msra.mxu0 0.0
    %105 = vmatpush.msra.mxu0 0.0
    %106 = vmatpush.msra.mxu0 0.0
    %107 = vmatpush.msra.mxu0 0.0
    %108 = vmatpush.msra.mxu0 0.0
    %109 = vmatpush.msra.mxu0 0.0
    %110 = vmatpush.msra.mxu0 0.0
    %111 = vmatpush.msra.mxu0 0.0
    %112 = vmatpush.msra.mxu0 0.0
    %113 = vmatpush.msra.mxu0 0.0
    %114 = vmatpush.msra.mxu0 0.0
    %115 = vmatpush.msra.mxu0 %v60
    %116 = vmatpush.msra.mxu0 %v59
    %117 = vmatmul.f32.gmra.mxu0 %v99
    %v118 = vpop.f32.mrf.mxu0
    %v119 = vadd.f32 %v96, %v118
    %120 = vdwg.mxu0
    %v121 = vmax.f32 %v119, 0.0
    %v122 = vperm.slane %v94, 0
    %123 = vmatpush.msra.mxu0 %v76
    %124 = vmatpush.msra.mxu0 %v75
    %125 = vmatpush.msra.mxu0 %v74
    %126 = vmatpush.msra.mxu0 %v73
    %127 = vmatpush.msra.mxu0 %v72
    %128 = vmatpush.msra.mxu0 %v71
    %129 = vmatpush.msra.mxu0 %v70
    %130 = vmatpush.msra.mxu0 %v69
    %131 = vmatpush.msra.mxu0 %v68
    %132 = vmatpush.msra.mxu0 %v67
    %133 = vmatpush.msra.mxu0 %v66
    %134 = vmatpush.msra.mxu0 %v65
    %135 = vmatpush.msra.mxu0 %v64
    %136 = vmatpush.msra.mxu0 %v63
    %137 = vmatpush.msra.mxu0 %v62
    %138 = vmatpush.msra.mxu0 %v61
    %139 = vmatmul.f32.gmra.mxu0 %v121
    %v140 = vpop.f32.mrf.mxu0
    %v141 = vadd.f32 %v122, %v140
    %142 = vdwg.mxu0
    %v143 = vmax.f32 %v141, 0.0
    %v144 = vperm.slane %v95, 0
    %145 = vmatpush.msra.mxu0 %v92
    %146 = vmatpush.msra.mxu0 %v91
    %147 = vmatpush.msra.mxu0 %v90
    %148 = vmatpush.msra.mxu0 %v89
    %149 = vmatpush.msra.mxu0 %v88
    %150 = vmatpush.msra.mxu0 %v87
    %151 = vmatpush.msra.mxu0 %v86
    %152 = vmatpush.msra.mxu0 %v85
    %153 = vmatpush.msra.mxu0 %v84
    %154 = vmatpush.msra.mxu0 %v83
    %155 = vmatpush.msra.mxu0 %v82
    %156 = vmatpush.msra.mxu0 %v81
    %157 = vmatpush.msra.mxu0 %v80
    %158 = vmatpush.msra.mxu0 %v79
    %159 = vmatpush.msra.mxu0 %v78
    %160 = vmatpush.msra.mxu0 %v77
    %161 = vmatmul.f32.gmra.mxu0 %v143
    %v162 = vpop.f32.mrf.mxu0
    %v163 = vadd.f32 %v144, %v162
    %164 = vdwg.mxu0
    %v165 = vtanh.pop %v163
    %166 = vst [vmem:[#allocation8] sm:$0xff] %v165
    // Predicated region
    $region26: #{tpu_custom_call.1} parent=1 // pred_check
      _
    $region27: #{tpu_custom_call.1} parent=1 // pred_check_branch
      %168 = sbr.rel (0) target = $region29
    $region28: #{tpu_custom_call.1} parent=1 // pred_region
      %170 = vsyncadd [#allocation4], 0
      %s172 = sshll.u32 [#allocation8], 4
      %s173 = int_to_ptr.vmem [resolvable:$true] %s172
      %s174 = sshll.u32 %s3, 4
      %s175 = int_to_ptr.hbm [resolvable:$true] %s174
      %177 = dma.vmem_to_hbm [thread:$0]  %s173, 128, %s175, [#allocation4]
    $region29: #{tpu_custom_call.1} parent=1 // pred_fallthru
      _
    // Predicated region
    $region30: #{tpu_custom_call.1} parent=1 // pred_check
      _
    $region31: #{tpu_custom_call.1} parent=1 // pred_check_branch
      %179 = sbr.rel (0) target = $region33
    $region32: #{tpu_custom_call.1} parent=1 // pred_region
      %181 = dma.done [#allocation4], 128
    $region33: #{tpu_custom_call.1} parent=1 // pred_fallthru
      _
    %182 = vsyncpa [#allocation3], 1
    %183 = vsyncpa [#allocation6], 1
    %184 = vsyncpa [#allocation4], 1

</llo_original>
